<compile_context>
chip_gen: v7x
topology: tpu7x:2x2x1
jax: 0.10.0
libtpu: 0.0.40
codegen_flags: <defaults>
</compile_context>

<pallas_src>
import functools
from typing import NamedTuple

import jax
import jax.numpy as jnp
from jax.experimental import pallas as pl
from jax.experimental.pallas import tpu as pltpu


def _round_up(v, m):
    return ((v + m - 1) // m) * m


def _vmem_cap_bytes():
    try:
        return int(pltpu.get_tpu_info().vmem_capacity_bytes)
    except Exception:
        return 64 * 1024 * 1024  # conservative: v7x per-TC VMEM


# ----------------------------- kernels -------------------------------------


def _swiglu_kernel_split(x_ref, wv_ref, wg_ref, bv_ref, bg_ref, o_ref,
                         acc_v_ref, acc_g_ref):
    """grid = (M/tm, N/tn, K/tk); separate val / gate weight streams."""
    k = pl.program_id(2)

    @pl.when(k == 0)
    def _():
        # Bias folded into the accumulator init (no epilogue adds).
        acc_v_ref[...] = jnp.broadcast_to(bv_ref[...], acc_v_ref.shape)
        acc_g_ref[...] = jnp.broadcast_to(bg_ref[...], acc_g_ref.shape)

    x = x_ref[...]
    acc_v_ref[...] += jnp.dot(x, wv_ref[...],
                              preferred_element_type=jnp.float32)
    acc_g_ref[...] += jnp.dot(x, wg_ref[...],
                              preferred_element_type=jnp.float32)

    @pl.when(k == pl.num_programs(2) - 1)
    def _():
        val = acc_v_ref[...]
        gate = acc_g_ref[...]
        o_ref[...] = (val * (gate * jax.nn.sigmoid(gate))).astype(o_ref.dtype)


def _swiglu_kernel_fused(x_ref, w_ref, b_ref, o_ref, acc_ref):
    """grid = (M/tm, K/tk); W_val|W_gate concatenated along N (small C_out).

    A single (tm, tk) x (tk, 2*128) matmul per k-step fills the 256-wide MXU
    instead of two half-width N=128 dots. Split only in the epilogue (the
    split point is a 128-lane boundary, so slicing is lane-aligned)."""
    k = pl.program_id(1)

    @pl.when(k == 0)
    def _():
        acc_ref[...] = jnp.broadcast_to(b_ref[...], acc_ref.shape)

    acc_ref[...] += jnp.dot(x_ref[...], w_ref[...],
                            preferred_element_type=jnp.float32)

    @pl.when(k == pl.num_programs(1) - 1)
    def _():
        half = o_ref.shape[-1]
        acc = acc_ref[...]
        val = acc[:, :half]
        gate = acc[:, half:]
        o_ref[...] = (val * (gate * jax.nn.sigmoid(gate))).astype(o_ref.dtype)


# ----------------------------- wrapper --------------------------------------


class SwiGLUPlan(NamedTuple):
    c_in: int
    c_in_pad: int
    c_out: int
    c_out_pad: int
    tn: int
    tk: int
    fused: bool


def swiglu_prepare(w, b, *, compute_dtype=jnp.bfloat16, tn=None, tk=None):
    """One-time weight preprocessing (hoisted out of the per-call hot path).

    w: (C_in, 2*C_out)  -- transpose of PyTorch's (2*C_out, C_in) weight.
    b: (2*C_out,)
    Returns (params, plan); reuse them across calls to swiglu_apply."""
    c_in, two_c_out = w.shape
    c_out = two_c_out // 2

    c_out_pad = _round_up(c_out, 128)          # lane-dense output stores
    fused = c_out_pad == 128                   # small C_out -> single fused dot

    if tn is None:
        tn = min(c_out_pad, 512)
    if tk is None:
        if c_in <= 1024:
            tk = c_in                          # single K step (block == full dim)
        elif c_in % 1024 == 0:
            tk = 1024
        else:
            tk = 512                           # pad K up to a multiple of 512
    c_in_pad = _round_up(c_in, tk)             # guarantee tk | K (no ragged K)

    w_val = w[:, :c_out].astype(compute_dtype)
    w_gate = w[:, c_out:].astype(compute_dtype)
    b_val = b[:c_out].astype(jnp.float32).reshape(1, c_out)
    b_gate = b[c_out:].astype(jnp.float32).reshape(1, c_out)

    pad_n = c_out_pad - c_out
    pad_k = c_in_pad - c_in
    if pad_n or pad_k:
        w_val = jnp.pad(w_val, ((0, pad_k), (0, pad_n)))
        w_gate = jnp.pad(w_gate, ((0, pad_k), (0, pad_n)))
        b_val = jnp.pad(b_val, ((0, 0), (0, pad_n)))
        b_gate = jnp.pad(b_gate, ((0, 0), (0, pad_n)))

    if fused:
        params = (jnp.concatenate([w_val, w_gate], axis=1),     # (K, 256)
                  jnp.concatenate([b_val, b_gate], axis=1))     # (1, 256)
    else:
        params = (w_val, w_gate, b_val, b_gate)

    plan = SwiGLUPlan(c_in, c_in_pad, c_out, c_out_pad, tn, tk, fused)
    return params, plan


@functools.partial(jax.jit, static_argnames=("plan", "tm", "out_dtype"))
def swiglu_apply(x, params, *, plan, tm=None, out_dtype=None):
    """SwiGLU forward. x: (..., C_in) -> (..., C_out)."""
    c_in, c_in_pad = plan.c_in, plan.c_in_pad
    c_out, c_out_pad = plan.c_out, plan.c_out_pad
    tn, tk = plan.tn, plan.tk

    if out_dtype is None:
        out_dtype = x.dtype                    # pass bf16 here to halve stores
    compute_dtype = params[0].dtype

    lead = x.shape[:-1]
    m = 1
    for d in lead:
        m *= d

    x2 = x.reshape(m, c_in).astype(compute_dtype)
    m_pad = _round_up(m, 16)
    if m_pad != m or c_in_pad != c_in:
        x2 = jnp.pad(x2, ((0, m_pad - m), (0, c_in_pad - c_in)))

    # --- M tile: bigger tm amortizes weight re-streaming (arith intensity vs
    #     weight traffic ~ tm FLOP/byte; v6e/v7x need ~600+ to be MXU-bound).
    if tm is None:
        tm = min(m_pad, 1024)
        # v7x has 2 TensorCores: keep >= 2 parallel (i, j) blocks when m allows.
        n_j = 1 if plan.fused else pl.cdiv(c_out_pad, tn)
        while (pl.cdiv(m_pad, tm) * n_j) < 2 and tm > 16 and tm % 32 == 0:
            tm //= 2

    out_isz = jnp.dtype(out_dtype).itemsize
    cd_isz = jnp.dtype(compute_dtype).itemsize

    if plan.fused:
        n_full = 2 * c_out_pad                                    # 256
        grid = (pl.cdiv(m_pad, tm), pl.cdiv(c_in_pad, tk))
        est = (2 * tm * tk * cd_isz                               # x tiles
               + 2 * tk * n_full * cd_isz                         # weight tiles
               + 2 * n_full * 4                                   # bias
               + 2 * tm * c_out_pad * out_isz                     # out tiles
               + tm * n_full * 4)                                 # accumulator
        kernel = _swiglu_kernel_fused
        grid_spec = pltpu.PrefetchScalarGridSpec(
            num_scalar_prefetch=0,
            grid=grid,
            in_specs=[
                pl.BlockSpec((tm, tk), lambda i, k: (i, k)),
                pl.BlockSpec((tk, n_full), lambda i, k: (k, 0)),
                pl.BlockSpec((1, n_full), lambda i, k: (0, 0)),
            ],
            out_specs=pl.BlockSpec((tm, c_out_pad), lambda i, k: (i, 0)),
            scratch_shapes=[pltpu.VMEM((tm, n_full), jnp.float32)],
        )
        dim_sem = ("parallel", "arbitrary")
    else:
        grid = (pl.cdiv(m_pad, tm), pl.cdiv(c_out_pad, tn),
                pl.cdiv(c_in_pad, tk))
        est = (2 * tm * tk * cd_isz                               # x tiles
               + 2 * 2 * tk * tn * cd_isz                         # w_val + w_gate
               + 2 * 2 * tn * 4                                   # biases
               + 2 * tm * tn * out_isz                            # out tiles
               + 2 * tm * tn * 4)                                 # accumulators
        kernel = _swiglu_kernel_split
        grid_spec = pltpu.PrefetchScalarGridSpec(
            num_scalar_prefetch=0,
            grid=grid,
            in_specs=[
                pl.BlockSpec((tm, tk), lambda i, j, k: (i, k)),
                pl.BlockSpec((tk, tn), lambda i, j, k: (k, j)),
                pl.BlockSpec((tk, tn), lambda i, j, k: (k, j)),
                pl.BlockSpec((1, tn), lambda i, j, k: (0, j)),
                pl.BlockSpec((1, tn), lambda i, j, k: (0, j)),
            ],
            out_specs=pl.BlockSpec((tm, tn), lambda i, j, k: (i, j)),
            scratch_shapes=[pltpu.VMEM((tm, tn), jnp.float32),
                            pltpu.VMEM((tm, tn), jnp.float32)],
        )
        dim_sem = ("parallel", "parallel", "arbitrary")

    # Clamp to 80% of this chip's VMEM: headroom for Mosaic internal scratch
    # on v7x (64 MiB), while still allowing big tiles on v5e/v6e (128 MiB).
    vmem_cap = _vmem_cap_bytes()
    vmem_limit = min(int(0.8 * vmem_cap), max(2 * est, 16 * 1024 * 1024))
    vmem_limit = max(vmem_limit, 16 * 1024 * 1024)

    out2 = pl.pallas_call(
        kernel,
        out_shape=jax.ShapeDtypeStruct((m_pad, c_out_pad), out_dtype),
        grid_spec=grid_spec,
        compiler_params=pltpu.CompilerParams(
            dimension_semantics=dim_sem,
            vmem_limit_bytes=vmem_limit,
        ),
    )(x2, *params)

    return out2[:m, :c_out].reshape(*lead, c_out)


def swiglu(x, w, b, **kwargs):
    """One-shot convenience wrapper. For repeated calls, run swiglu_prepare
    once and reuse (params, plan) with swiglu_apply."""
    params, plan = swiglu_prepare(w, b)
    return swiglu_apply(x, params, plan=plan, **kwargs)


# ------------------------------- demo ---------------------------------------

if __name__ == "__main__":
    key = jax.random.PRNGKey(0)

    def _check(channels_in, channels_out, batch, seq, subkey):
        kx, kw, kb = jax.random.split(subkey, 3)
        x = jax.random.normal(kx, (batch, seq, channels_in), dtype=jnp.float32)
        # PyTorch stores W as (2*C_out, C_in); we keep the transposed layout.
        w = jax.random.normal(kw, (channels_in, 2 * channels_out),
                              dtype=jnp.float32) * 0.05
        b = jax.random.normal(kb, (2 * channels_out,), dtype=jnp.float32) * 0.01

        params, plan = swiglu_prepare(w, b)          # one-time weight prep
        out = swiglu_apply(x, params, plan=plan)     # hot-path call
        jax.block_until_ready(out)
        assert out.shape == (batch, seq, channels_out)

        # Reference 1: mirror the kernel's bf16-MXU / f32-accumulate path.
        y_bf = jnp.dot(x.astype(jnp.bfloat16).reshape(-1, channels_in),
                       w.astype(jnp.bfloat16),
                       preferred_element_type=jnp.float32) + b
        v_bf, g_bf = jnp.split(y_bf, 2, axis=-1)
        ref_bf = (v_bf * (g_bf * jax.nn.sigmoid(g_bf))).reshape(
            batch, seq, channels_out)
        assert jnp.allclose(out, ref_bf, atol=1e-3, rtol=1e-3), (
            float(jnp.max(jnp.abs(out - ref_bf))))

        # Reference 2: full-f32 semantics of the PyTorch module (loose tol
        # accounts for bf16 MXU inputs).
        y_f32 = x @ w + b
        v_f32, g_f32 = jnp.split(y_f32, 2, axis=-1)
        ref_f32 = v_f32 * (g_f32 * jax.nn.sigmoid(g_f32))
        assert jnp.allclose(out, ref_f32, atol=5e-2, rtol=5e-2), (
            float(jnp.max(jnp.abs(out - ref_f32))))

    k1, k2 = jax.random.split(key)
    # Module config: SwiGLU(channels_in=32, channels_out=64) -> fused path
    _check(32, 64, 2, 8, k1)
    # Larger C_out -> split (M, N, K) path with separate val/gate streams
    _check(128, 256, 2, 8, k2)

    print("KERNEL_OK")
</pallas_src>

<mosaic_0001>
module attributes {stable_mosaic.version = 11 : i64} {
  func.func @_swiglu_kernel_fused(%arg0: i32, %arg1: i32, %arg2: memref<16x32xbf16, #tpu.memory_space<vmem>>, %arg3: memref<32x256xbf16, #tpu.memory_space<vmem>>, %arg4: memref<1x256xf32, #tpu.memory_space<vmem>>, %arg5: memref<16x128xf32, #tpu.memory_space<vmem>>, %arg6: memref<16x256xf32, #tpu.memory_space<vmem>>) attributes {dimension_semantics = [#tpu.dimension_semantics<parallel>, #tpu.dimension_semantics<arbitrary>], iteration_bounds = array<i64: 1, 1>, scalar_prefetch = 0 : i64, scratch_operands = 1 : i64, tpu.core_type = #tpu.core_type<tc>, window_params = [{transform_indices = @transform_0, window_bounds = array<i64: 16, 32>}, {transform_indices = @transform_1, window_bounds = array<i64: 32, 256>}, {pipeline_mode = #tpu.pipeline_mode<synchronous>, transform_indices = @transform_2, window_bounds = array<i64: 1, 256>}, {transform_indices = @transform_3, window_bounds = array<i64: 16, 128>}]} {
    %c0_i32 = arith.constant 0 : i32
    %0 = arith.cmpi eq, %arg1, %c0_i32 : i32
    %1 = arith.extui %0 : i1 to i32
    %c0_i32_0 = arith.constant 0 : i32
    %2 = arith.cmpi ne, %1, %c0_i32_0 : i32
    scf.if %2 {
      %c0_10 = arith.constant 0 : index
      %c0_11 = arith.constant 0 : index
      %12 = vector.load %arg4[%c0_10, %c0_11] : memref<1x256xf32, #tpu.memory_space<vmem>>, vector<1x256xf32>
      %13 = vector.shape_cast %12 : vector<1x256xf32> to vector<1x256xf32>
      %14 = vector.broadcast %13 : vector<1x256xf32> to vector<16x256xf32>
      %c0_12 = arith.constant 0 : index
      %c0_13 = arith.constant 0 : index
      %15 = vector.load %arg6[%c0_12, %c0_13] : memref<16x256xf32, #tpu.memory_space<vmem>>, vector<16x256xf32>
      tpu.vector_store %arg6[%c0_12, %c0_13], %14 {strides = array<i32>} : memref<16x256xf32, #tpu.memory_space<vmem>>, vector<16x256xf32>,
    } else {
    }
    %c0 = arith.constant 0 : index
    %c0_1 = arith.constant 0 : index
    %3 = vector.load %arg6[%c0, %c0_1] : memref<16x256xf32, #tpu.memory_space<vmem>>, vector<16x256xf32>
    %c0_2 = arith.constant 0 : index
    %c0_3 = arith.constant 0 : index
    %4 = vector.load %arg2[%c0_2, %c0_3] : memref<16x32xbf16, #tpu.memory_space<vmem>>, vector<16x32xbf16>
    %c0_4 = arith.constant 0 : index
    %c0_5 = arith.constant 0 : index
    %5 = vector.load %arg3[%c0_4, %c0_5] : memref<32x256xbf16, #tpu.memory_space<vmem>>, vector<32x256xbf16>
    %cst = arith.constant dense<0.000000e+00> : vector<16x256xf32>
    %6 = tpu.matmul %4, %5, %cst {dimension_numbers = #tpu.dot_dimension_numbers<[1], [0], [0], [1], [0, 0, 1, 1], [], []>} : vector<16x32xbf16>, vector<32x256xbf16>, vector<16x256xf32> -> vector<16x256xf32>
    %7 = arith.addf %3, %6 : vector<16x256xf32>
    %c0_6 = arith.constant 0 : index
    %c0_7 = arith.constant 0 : index
    %8 = vector.load %arg6[%c0_6, %c0_7] : memref<16x256xf32, #tpu.memory_space<vmem>>, vector<16x256xf32>
    tpu.vector_store %arg6[%c0_6, %c0_7], %7 {strides = array<i32>} : memref<16x256xf32, #tpu.memory_space<vmem>>, vector<16x256xf32>,
    %c0_i32_8 = arith.constant 0 : i32
    %9 = arith.cmpi eq, %arg1, %c0_i32_8 : i32
    %10 = arith.extui %9 : i1 to i32
    %c0_i32_9 = arith.constant 0 : i32
    %11 = arith.cmpi ne, %10, %c0_i32_9 : i32
    scf.if %11 {
      %c0_10 = arith.constant 0 : index
      %c0_11 = arith.constant 0 : index
      %12 = vector.load %arg6[%c0_10, %c0_11] : memref<16x256xf32, #tpu.memory_space<vmem>>, vector<16x256xf32>
      %13 = vector.extract_strided_slice %12 {offsets = [0, 0], sizes = [16, 128], strides = [1, 1]} : vector<16x256xf32> to vector<16x128xf32>
      %14 = vector.extract_strided_slice %12 {offsets = [0, 128], sizes = [16, 128], strides = [1, 1]} : vector<16x256xf32> to vector<16x128xf32>
      %15 = arith.negf %14 : vector<16x128xf32>
      %16 = math.exp %15 : vector<16x128xf32>
      %cst_12 = arith.constant 1.000000e+00 : f32
      %17 = vector.broadcast %cst_12 : f32 to vector<16x128xf32>
      %18 = arith.addf %17, %16 : vector<16x128xf32>
      %19 = arith.divf %17, %18 : vector<16x128xf32>
      %20 = arith.mulf %14, %19 : vector<16x128xf32>
      %21 = arith.mulf %13, %20 : vector<16x128xf32>
      %c0_13 = arith.constant 0 : index
      %c0_14 = arith.constant 0 : index
      %22 = vector.load %arg5[%c0_13, %c0_14] : memref<16x128xf32, #tpu.memory_space<vmem>>, vector<16x128xf32>
      tpu.vector_store %arg5[%c0_13, %c0_14], %21 {strides = array<i32>} : memref<16x128xf32, #tpu.memory_space<vmem>>, vector<16x128xf32>,
    } else {
    }
    return
  }
  func.func @transform_0(%arg0: i32, %arg1: i32) -> (i32, i32) {
    %c0_i32 = arith.constant 0 : i32
    return %arg0, %arg1 : i32, i32
  }
  func.func @transform_1(%arg0: i32, %arg1: i32) -> (i32, i32) {
    %c0_i32 = arith.constant 0 : i32
    %c0_i32_0 = arith.constant 0 : i32
    return %arg1, %c0_i32 : i32, i32
  }
  func.func @transform_2(%arg0: i32, %arg1: i32) -> (i32, i32) {
    %c0_i32 = arith.constant 0 : i32
    %c0_i32_0 = arith.constant 0 : i32
    %c0_i32_1 = arith.constant 0 : i32
    return %c0_i32, %c0_i32_0 : i32, i32
  }
  func.func @transform_3(%arg0: i32, %arg1: i32) -> (i32, i32) {
    %c0_i32 = arith.constant 0 : i32
    %c0_i32_0 = arith.constant 0 : i32
    return %arg0, %c0_i32 : i32, i32
  }
}

</mosaic_0001>

<llo_original>
// kernel: swiglu_apply.1
$region0: #{swiglu_apply.1}
  #allocation0 [shape = 'u32[]', space=smem, size = 0x4, offset = 0x4, fixed_abs, tag = 'smem constant byte address 0x4 - core index']
  #allocation1 [shape = 'u32[144,128]{1,0:T(1,128)}', space=vmem, size = 0x12000, scoped, tag = 'internal scratch']
  #allocation2 [shape = 'f32[16,256]{1,0:T(8,128)}', space=vmem, size = 0x4000, scoped, tag = 'scratch operand']
  %s0 = inlined_call_operand.vmem [shape: bf16[16,32], index: 0, kind: input, shape index: {}]
  %s1 = inlined_call_operand.hbm [shape: bf16[32,256], index: 1, kind: input, shape index: {}]
  %s2 = inlined_call_operand.vmem [shape: f32[1,256], index: 2, kind: input, shape index: {}]
  %s3 = inlined_call_operand.vmem [shape: f32[16,128], index: 3, kind: output, shape index: {}]
  %s4 = sld [smem:[#allocation0]]
  $region34: #{swiglu_apply.1} parent=0
    _
  %s6 = ssub.s32 1, %s4
  %s7 = scalar_select 0, %s6, %s4
  $region1: #{swiglu_apply.1} parent=0
    #allocation3 [shape = 'u8[16384]{0}', space=vmem, size = 0x4000, scoped, tag = 'input window, operand 1, single buffered']
    #allocation4 [shape = 's32[1]{0}', space=sflag, size = 0x4, scoped, tag = 'scoped memory for swiglu_apply.1']
    %8 = vsyncpa [#allocation4], 0
    // Predicated region
    $region2: #{swiglu_apply.1} parent=1 // pred_check
      _
    $region3: #{swiglu_apply.1} parent=1 // pred_check_branch
      %10 = sbr.rel (0) target = $region5
    $region4: #{swiglu_apply.1} parent=1 // pred_region
      _
    $region5: #{swiglu_apply.1} parent=1 // pred_fallthru
      _
    // Predicated region
    $region6: #{swiglu_apply.1} parent=1 // pred_check
      _
    $region7: #{swiglu_apply.1} parent=1 // pred_check_branch
      %12 = sbr.rel (0) target = $region9
    $region8: #{swiglu_apply.1} parent=1 // pred_region
      %s14 = ssub.s32 512, 512
      %15 = vsyncadd [#allocation4], %s14
      %s16 = sshll.u32 [#allocation3], 4
      %s17 = int_to_ptr.vmem [resolvable:$true] %s16
      %22 = dma.hbm_to_vmem [thread:$0]  %s1, 512, %s17, [#allocation4], 128, 128, 8
    $region9: #{swiglu_apply.1} parent=1 // pred_fallthru
      _
    // Predicated region
    $region10: #{swiglu_apply.1} parent=1 // pred_check
      _
    $region11: #{swiglu_apply.1} parent=1 // pred_check_branch
      %24 = sbr.rel (0) target = $region13
    $region12: #{swiglu_apply.1} parent=1 // pred_region
      _
    $region13: #{swiglu_apply.1} parent=1 // pred_fallthru
      _
    // Predicated region
    $region14: #{swiglu_apply.1} parent=1 // pred_check
      _
    $region15: #{swiglu_apply.1} parent=1 // pred_check_branch
      %26 = sbr.rel (0) target = $region17
    $region16: #{swiglu_apply.1} parent=1 // pred_region
      %27 = dma.done [#allocation4], 512
    $region17: #{swiglu_apply.1} parent=1 // pred_fallthru
      _
    %p29 = scmp.eq.s32.totalorder 0, 0
    // Predicated region
    $region18: #{swiglu_apply.1} parent=1 // pred_check
      %p30 = pneg %p29
    $region19: #{swiglu_apply.1} parent=1 // pred_check_branch
      %32 = sbr.rel (%p30) target = $region21
    $region20: #{swiglu_apply.1} parent=1 // pred_region
      %v33 = vld [vmem:[%s2] sm:$0x3]
      %v35 = vlaneseq
      %v36 = vshrl.u32 %v35, 7
      %v37 = vsub.s32 0, %v36
      %v38 = vrot.slane %v33, %v37
      %v39 = vlaneseq
      %v40 = vshrl.u32 %v39, 7
      %v41 = vsub.s32 1, %v40
      %v42 = vrot.slane %v33, %v41
      %45 = vst [vmem:[#allocation2] sm:$0xff] %v38
      %46 = vst [vmem:[#allocation2 + $0x8] sm:$0xff] %v42
      %47 = vst [vmem:[#allocation2 + $0x10] sm:$0xff] %v38
      %48 = vst [vmem:[#allocation2 + $0x18] sm:$0xff] %v42
    $region21: #{swiglu_apply.1} parent=1 // pred_fallthru
      _
    %v49 = vld [vmem:[#allocation2] sm:$0xff]
    %v50 = vld [vmem:[#allocation2 + $0x8] sm:$0xff]
    %v51 = vld [vmem:[#allocation2 + $0x10] sm:$0xff]
    %v52 = vld [vmem:[#allocation2 + $0x18] sm:$0xff]
    %v53 = vld [vmem:[%s0] sm:$0xf]
    %v54 = vld [vmem:[%s0 + $0x4] sm:$0xf]
    %v55 = vld [vmem:[#allocation3] sm:$0xff]
    %v56 = vld [vmem:[#allocation3 + $0x8] sm:$0xff]
    %v57 = vld [vmem:[#allocation3 + $0x10] sm:$0xff]
    %v58 = vld [vmem:[#allocation3 + $0x18] sm:$0xff]
    %v61 = vunpack.c.l.b16 %v53
    %v62 = vunpack.c.l.b16 %v54
    %v63 = vpack.c.b16 %v62, %v61
    %v68 = vunpack.c.l.b16 %v55
    %v69 = vunpack.c.h.b16 %v55
    %v70 = vunpack.c.l.b16 %v56
    %v71 = vunpack.c.h.b16 %v56
    %v72 = vunpack.c.l.b16 %v57
    %v73 = vunpack.c.h.b16 %v57
    %v74 = vunpack.c.l.b16 %v58
    %v75 = vunpack.c.h.b16 %v58
    %v76 = vpack.c.b16 %v70, %v68
    %v77 = vpack.c.b16 %v71, %v69
    %v78 = vpack.c.b16 %v74, %v72
    %v79 = vpack.c.b16 %v75, %v73
    %vm84 = vcmask 261120
    %v86 = vsel %vm84, %v63, 0
    %88 = vmatprep.subr.bf16.mxu0 %v77
    %89 = vmatpush1.bf16.msra.mxu0 %v76
    %90 = vmatprep.subr.bf16.mxu0 %v79
    %91 = vmatpush1.bf16.msra.mxu0 %v78
    %92 = vmatprep.subr.bf16.mxu0 0
    %93 = vmatpush1.bf16.msra.mxu0 0
    %94 = vmatprep.subr.bf16.mxu0 0
    %95 = vmatpush1.bf16.msra.mxu0 0
    %96 = vmatprep.subr.bf16.mxu0 0
    %97 = vmatpush1.bf16.msra.mxu0 0
    %98 = vmatprep.subr.bf16.mxu0 0
    %99 = vmatpush1.bf16.msra.mxu0 0
    %100 = vmatprep.subr.bf16.mxu0 0
    %101 = vmatpush1.bf16.msra.mxu0 0
    %102 = vmatprep.subr.bf16.mxu0 0
    %103 = vmatpush1.bf16.msra.mxu0 0
    %104 = vmatprep.subr.bf16.mxu0 0
    %105 = vmatpush1.bf16.msra.mxu0 0
    %106 = vmatprep.subr.bf16.mxu0 0
    %107 = vmatpush1.bf16.msra.mxu0 0
    %108 = vmatprep.subr.bf16.mxu0 0
    %109 = vmatpush1.bf16.msra.mxu0 0
    %110 = vmatprep.subr.bf16.mxu0 0
    %111 = vmatpush1.bf16.msra.mxu0 0
    %112 = vmatprep.subr.bf16.mxu0 0
    %113 = vmatpush1.bf16.msra.mxu0 0
    %114 = vmatprep.subr.bf16.mxu0 0
    %115 = vmatpush1.bf16.msra.mxu0 0
    %116 = vmatprep.subr.bf16.mxu0 0
    %117 = vmatpush1.bf16.msra.mxu0 0
    %118 = vmatprep.subr.bf16.mxu0 0
    %119 = vmatpush1.bf16.msra.mxu0 0
    %120 = vmatprep.mubr.bf16.mxu0 0
    %121 = vmatmul.mubr.bf16.gmra.mrb[0].mxu0 %v86
    %v122 = vpop.f32.mrb[0].mxu0
    %v123 = vadd.f32 0.0, %v122
    %v124 = vpop.f32.mrb[0].mxu0
    %v125 = vadd.f32 0.0, %v124
    %v126 = vpop.f32.mrb[0].mxu0
    %v127 = vadd.f32 0.0, %v126
    %v128 = vpop.f32.mrb[0].mxu0
    %v129 = vadd.f32 0.0, %v128
    %130 = vdwg.mxu0
    %v131 = vadd.f32 %v49, %v123
    %v132 = vadd.f32 %v50, %v125
    %v133 = vadd.f32 %v51, %v127
    %v134 = vadd.f32 %v52, %v129
    %135 = vst [vmem:[#allocation2] sm:$0xff] %v131
    %136 = vst [vmem:[#allocation2 + $0x8] sm:$0xff] %v132
    %137 = vst [vmem:[#allocation2 + $0x10] sm:$0xff] %v133
    %138 = vst [vmem:[#allocation2 + $0x18] sm:$0xff] %v134
    // Predicated region
    $region22: #{swiglu_apply.1} parent=1 // pred_check
      %p139 = pneg %p29
    $region23: #{swiglu_apply.1} parent=1 // pred_check_branch
      %141 = sbr.rel (%p139) target = $region25
    $region24: #{swiglu_apply.1} parent=1 // pred_region
      %v142 = vld [vmem:[#allocation2] sm:$0xff]
      %v143 = vld [vmem:[#allocation2 + $0x8] sm:$0xff]
      %v144 = vld [vmem:[#allocation2 + $0x10] sm:$0xff]
      %v145 = vld [vmem:[#allocation2 + $0x18] sm:$0xff]
      %v146 = vxor.u32 %v143, 2147483648
      %v147 = vxor.u32 %v145, 2147483648
      %v148 = vmul.f32 %v146, 1.442695
      %v149 = vpow.pop %v148
      %v150 = vmul.f32 %v147, 1.442695
      %v151 = vpow.pop %v150
      %v152 = vadd.f32 %v149, 1.0
      %v153 = vadd.f32 %v151, 1.0
      %v154 = vrcp.pop %v152
      %v155 = vmul.f32 1.0, %v154
      %v156 = vrcp.pop %v153
      %v157 = vmul.f32 1.0, %v156
      %v158 = vmul.f32 %v143, %v155
      %v159 = vmul.f32 %v145, %v157
      %v160 = vmul.f32 %v142, %v158
      %v161 = vmul.f32 %v144, %v159
      %162 = vst [vmem:[%s3] sm:$0xff] %v160
      %163 = vst [vmem:[%s3 + $0x8] sm:$0xff] %v161
    $region25: #{swiglu_apply.1} parent=1 // pred_fallthru
      _
    // Predicated region
    $region26: #{swiglu_apply.1} parent=1 // pred_check
      _
    $region27: #{swiglu_apply.1} parent=1 // pred_check_branch
      %165 = sbr.rel (0) target = $region29
    $region28: #{swiglu_apply.1} parent=1 // pred_region
      _
    $region29: #{swiglu_apply.1} parent=1 // pred_fallthru
      _
    // Predicated region
    $region30: #{swiglu_apply.1} parent=1 // pred_check
      _
    $region31: #{swiglu_apply.1} parent=1 // pred_check_branch
      %167 = sbr.rel (0) target = $region33
    $region32: #{swiglu_apply.1} parent=1 // pred_region
      _
    $region33: #{swiglu_apply.1} parent=1 // pred_fallthru
      _
    %168 = vsyncpa [#allocation4], 1

</llo_original>
